<compile_context>
chip_gen: v6e
topology: v6e:2x2x1
jax: 0.10.0
libtpu: 0.0.40
codegen_flags: <defaults>
</compile_context>

<pallas_src>
import jax
import jax.numpy as jnp
from jax.experimental import pallas as pl
from jax.experimental.pallas import tpu as pltpu


def _round_up(x: int, m: int) -> int:
    return ((x + m - 1) // m) * m


def _tpu_generation() -> str:
    try:
        kind = jax.devices()[0].device_kind.lower()
    except Exception:
        return ""
    for gen in ("v7", "v6", "v5"):
        if gen in kind:
            return gen
    return ""


def _default_tuning(gen: str):
    """(tm, th, vmem_limit_bytes) per TPU generation."""
    if gen == "v6":   # 128 MiB VMEM, roofline crossover ~650 F/B -> big token tile
        return 1024, 512, 96 * 1024 * 1024
    if gen == "v7":   # 64 MiB VMEM, crossover ~310 F/B -> tm=512 already MXU-bound
        return 512, 512, 56 * 1024 * 1024
    # v5e (16 MiB scoped default -> explicit raise is the key enabler) / unknown
    return 512, 256, 48 * 1024 * 1024


# ----------------------------- kernels -------------------------------------

def _mlp_kernel_acc_in_out(x_ref, w1_ref, b1_ref, w2_ref, b2_ref, o_ref):
    """f32 output: accumulate fc2 partial products directly into o_ref
    (output block index ignores k, so the tile stays resident across the
    reduction axis -- no separate accumulator scratch, no final copy)."""
    k = pl.program_id(1)

    @pl.when(k == 0)
    def _():
        o_ref[...] = jnp.broadcast_to(b2_ref[...], o_ref.shape)

    # fc1 for this hidden tile: bf16 operands, f32 accumulate; bias+ReLU in f32.
    # (Dropout with p=0.0 is the identity, so it is omitted.)
    h = jnp.dot(x_ref[...], w1_ref[...], preferred_element_type=jnp.float32)
    h = jnp.maximum(h + b1_ref[...], 0.0)

    # fc2 partial product for this hidden tile, accumulated in f32.
    o_ref[...] += jnp.dot(h.astype(w2_ref.dtype), w2_ref[...],
                          preferred_element_type=jnp.float32)


def _mlp_kernel_scratch_acc(x_ref, w1_ref, b1_ref, w2_ref, b2_ref, o_ref, acc_ref):
    """Non-f32 (e.g. bf16) output: f32 VMEM accumulator, one downcast at k==last."""
    k = pl.program_id(1)

    @pl.when(k == 0)
    def _():
        acc_ref[...] = jnp.broadcast_to(b2_ref[...], acc_ref.shape)

    h = jnp.dot(x_ref[...], w1_ref[...], preferred_element_type=jnp.float32)
    h = jnp.maximum(h + b1_ref[...], 0.0)
    acc_ref[...] += jnp.dot(h.astype(w2_ref.dtype), w2_ref[...],
                            preferred_element_type=jnp.float32)

    @pl.when(k == pl.num_programs(1) - 1)
    def _():
        o_ref[...] = acc_ref[...].astype(o_ref.dtype)


# ----------------------------- host wrappers --------------------------------

def prepare_mlp_weights(w1, b1, w2, b2, *, compute_dtype=jnp.bfloat16,
                        h_align=512):
    """Pad + cast the Mlp weights ONCE (do this at model init, NOT per forward).

    Layout (transposed vs. PyTorch nn.Linear so the kernel does x @ W + b):
      w1: (D_in, H), b1: (H,), w2: (H, D_out), b2: (D_out,)
    """
    cdt = jnp.dtype(compute_dtype)
    D_in, H = w1.shape
    D_out = w2.shape[1]

    d_in_p = _round_up(D_in, 128)
    d_out_p = _round_up(D_out, 128)
    # Pad H so that 128/256/512 hidden tiles all divide it when possible.
    h_p = _round_up(H, min(h_align, _round_up(H, 128)))

    w1_p = jnp.zeros((d_in_p, h_p), cdt).at[:D_in, :H].set(w1.astype(cdt))
    w2_p = jnp.zeros((h_p, d_out_p), cdt).at[:H, :D_out].set(w2.astype(cdt))
    b1_p = jnp.zeros((1, h_p), jnp.float32).at[0, :H].set(b1.astype(jnp.float32))
    b2_p = jnp.zeros((1, d_out_p), jnp.float32).at[0, :D_out].set(
        b2.astype(jnp.float32))

    return dict(w1=w1_p, b1=b1_p, w2=w2_p, b2=b2_p,
                d_in=D_in, hidden=H, d_out=D_out,
                d_in_p=d_in_p, h_p=h_p, d_out_p=d_out_p,
                compute_dtype=cdt)


def mlp_pallas(x, params, *, tm=None, th=None, out_dtype=None,
               vmem_limit_bytes=None):
    """Fused MLP forward: y = relu(x @ W1 + b1) @ W2 + b2.

    x: (B, S, D_in). `params` comes from prepare_mlp_weights (padded, bf16).
    """
    gen = _tpu_generation()
    tm_d, th_d, vmem_d = _default_tuning(gen)
    tm = tm_d if tm is None else tm
    th = th_d if th is None else th
    vmem_limit_bytes = vmem_d if vmem_limit_bytes is None else vmem_limit_bytes

    cdt = params["compute_dtype"]
    D_in, D_out = params["d_in"], params["d_out"]
    d_in_p, h_p, d_out_p = params["d_in_p"], params["h_p"], params["d_out_p"]

    B, S, Dx = x.shape
    assert Dx == D_in, (Dx, D_in)
    M = B * S
    out_dtype = jnp.dtype(x.dtype if out_dtype is None else out_dtype)

    # Token tile: native sublane multiple (16 for bf16 operands), clamp to M.
    sub = 16 if cdt.itemsize == 2 else 8
    tm = max(sub, min(_round_up(tm, sub), _round_up(M, sub)))
    if gen == "v7" and M > tm:
        # 2 TensorCores per chip: make sure there are at least 2 i-tiles.
        tm = min(tm, max(sub, _round_up(-(-M // 2), sub)))
    m_p = _round_up(M, tm)

    # Hidden tile: largest of {512, 256, 128} that divides padded H.
    th_req = max(128, min(th, h_p))
    th = 128
    for cand in (512, 256, 128):
        if cand <= th_req and h_p % cand == 0:
            th = cand
            break
    grid = (m_p // tm, h_p // th)

    # Activations: cast once; only materialize a zero-padded copy if ragged.
    x2d = x.reshape(M, D_in)
    if x2d.dtype != cdt:
        x2d = x2d.astype(cdt)
    if (m_p, d_in_p) != (M, D_in):
        x2d = jnp.zeros((m_p, d_in_p), cdt).at[:M, :D_in].set(x2d)

    # Realistic traffic estimate: weights are re-streamed once per i-tile.
    w_bytes = ((params["w1"].size + params["w2"].size) * cdt.itemsize
               + (params["b1"].size + params["b2"].size) * 4)
    cost = pl.CostEstimate(
        flops=2 * m_p * (d_in_p * h_p + h_p * d_out_p),
        transcendentals=0,
        bytes_accessed=(m_p * d_in_p * cdt.itemsize
                        + grid[0] * w_bytes
                        + m_p * d_out_p * out_dtype.itemsize),
    )

    use_scratch = out_dtype != jnp.dtype(jnp.float32)
    kernel = _mlp_kernel_scratch_acc if use_scratch else _mlp_kernel_acc_in_out
    scratch = [pltpu.VMEM((tm, d_out_p), jnp.float32)] if use_scratch else []

    out2d = pl.pallas_call(
        kernel,
        out_shape=jax.ShapeDtypeStruct((m_p, d_out_p), out_dtype),
        grid_spec=pltpu.PrefetchScalarGridSpec(
            num_scalar_prefetch=0,
            grid=grid,
            in_specs=[
                pl.BlockSpec((tm, d_in_p), lambda i, k: (i, 0)),    # x token tile
                pl.BlockSpec((d_in_p, th), lambda i, k: (0, k)),    # W1 hidden tile
                pl.BlockSpec((1, th), lambda i, k: (0, k)),         # b1 hidden tile
                pl.BlockSpec((th, d_out_p), lambda i, k: (k, 0)),   # W2 hidden tile
                pl.BlockSpec((1, d_out_p), lambda i, k: (0, 0)),    # b2 (constant)
            ],
            out_specs=pl.BlockSpec((tm, d_out_p), lambda i, k: (i, 0)),
            scratch_shapes=scratch,
        ),
        compiler_params=pltpu.CompilerParams(
            dimension_semantics=("parallel", "arbitrary"),
            vmem_limit_bytes=vmem_limit_bytes,
        ),
        cost_estimate=cost,
    )(x2d, params["w1"], params["b1"], params["w2"], params["b2"])

    if (m_p, d_out_p) != (M, D_out):
        out2d = out2d[:M, :D_out]
    return out2d.reshape(B, S, D_out)


if __name__ == "__main__":
    # Small config consistent with Mlp(in_features, hidden_features, out_features).
    B, S = 2, 8
    in_features = 32
    hidden_features = 256   # > th so the reduction (accumulator) path is exercised
    out_features = 32

    key = jax.random.PRNGKey(0)
    kx, k1, k2, k3, k4 = jax.random.split(key, 5)

    x = jax.random.normal(kx, (B, S, in_features), dtype=jnp.float32)
    # nn.Linear weights stored transposed: (in, out).
    w1 = jax.random.normal(k1, (in_features, hidden_features), jnp.float32) * 0.05
    b1 = jax.random.normal(k2, (hidden_features,), jnp.float32) * 0.05
    w2 = jax.random.normal(k3, (hidden_features, out_features), jnp.float32) * 0.05
    b2 = jax.random.normal(k4, (out_features,), jnp.float32) * 0.05

    # Pad/cast weights ONCE (model init), not per forward call.
    params = prepare_mlp_weights(w1, b1, w2, b2)

    # Small tiles so the toy problem has a nontrivial (i, k) grid.
    y = mlp_pallas(x, params, tm=16, th=128)               # f32 out (acc-in-out path)
    y = jax.block_until_ready(y)

    # Also exercise the bf16-output (scratch accumulator) path.
    y_bf16 = mlp_pallas(x, params, tm=16, th=128, out_dtype=jnp.bfloat16)
    y_bf16 = jax.block_until_ready(y_bf16)

    # Pure-JAX f32 reference (dropout p=0 is identity). Kernel uses bf16 MXU
    # operands with f32 accumulation, so compare with bf16-appropriate tolerance.
    ref = jnp.maximum(x @ w1 + b1, 0.0) @ w2 + b2
    assert y.shape == (B, S, out_features)
    assert jnp.allclose(y, ref, atol=2e-2, rtol=2e-2), (
        float(jnp.max(jnp.abs(y - ref))))
    assert jnp.allclose(y_bf16.astype(jnp.float32), ref, atol=5e-2, rtol=5e-2), (
        float(jnp.max(jnp.abs(y_bf16.astype(jnp.float32) - ref))))

    print("KERNEL_OK")
</pallas_src>

<mosaic_0001>
module attributes {stable_mosaic.version = 11 : i64} {
  func.func @_mlp_kernel_acc_in_out(%arg0: i32, %arg1: i32, %arg2: memref<16x128xbf16, #tpu.memory_space<vmem>>, %arg3: memref<128x128xbf16, #tpu.memory_space<vmem>>, %arg4: memref<1x128xf32, #tpu.memory_space<vmem>>, %arg5: memref<128x128xbf16, #tpu.memory_space<vmem>>, %arg6: memref<1x128xf32, #tpu.memory_space<vmem>>, %arg7: memref<16x128xf32, #tpu.memory_space<vmem>>) attributes {dimension_semantics = [#tpu.dimension_semantics<parallel>, #tpu.dimension_semantics<arbitrary>], iteration_bounds = array<i64: 1, 2>, scalar_prefetch = 0 : i64, scratch_operands = 0 : i64, tpu.core_type = #tpu.core_type<tc>, window_params = [{transform_indices = @transform_0, window_bounds = array<i64: 16, 128>}, {transform_indices = @transform_1, window_bounds = array<i64: 128, 128>}, {transform_indices = @transform_2, window_bounds = array<i64: 1, 128>}, {transform_indices = @transform_3, window_bounds = array<i64: 128, 128>}, {pipeline_mode = #tpu.pipeline_mode<synchronous>, transform_indices = @transform_4, window_bounds = array<i64: 1, 128>}, {transform_indices = @transform_5, window_bounds = array<i64: 16, 128>}]} {
    %c0_i32 = arith.constant 0 : i32
    %0 = arith.cmpi eq, %arg1, %c0_i32 : i32
    %1 = arith.extui %0 : i1 to i32
    %c0_i32_0 = arith.constant 0 : i32
    %2 = arith.cmpi ne, %1, %c0_i32_0 : i32
    scf.if %2 {
      %c0_14 = arith.constant 0 : index
      %c0_15 = arith.constant 0 : index
      %17 = vector.load %arg6[%c0_14, %c0_15] : memref<1x128xf32, #tpu.memory_space<vmem>>, vector<1x128xf32>
      %18 = vector.shape_cast %17 : vector<1x128xf32> to vector<1x128xf32>
      %19 = vector.broadcast %18 : vector<1x128xf32> to vector<16x128xf32>
      %c0_16 = arith.constant 0 : index
      %c0_17 = arith.constant 0 : index
      %20 = vector.load %arg7[%c0_16, %c0_17] : memref<16x128xf32, #tpu.memory_space<vmem>>, vector<16x128xf32>
      tpu.vector_store %arg7[%c0_16, %c0_17], %19 {strides = array<i32>} : memref<16x128xf32, #tpu.memory_space<vmem>>, vector<16x128xf32>,
    } else {
    }
    %c0 = arith.constant 0 : index
    %c0_1 = arith.constant 0 : index
    %3 = vector.load %arg2[%c0, %c0_1] : memref<16x128xbf16, #tpu.memory_space<vmem>>, vector<16x128xbf16>
    %c0_2 = arith.constant 0 : index
    %c0_3 = arith.constant 0 : index
    %4 = vector.load %arg3[%c0_2, %c0_3] : memref<128x128xbf16, #tpu.memory_space<vmem>>, vector<128x128xbf16>
    %cst = arith.constant dense<0.000000e+00> : vector<16x128xf32>
    %5 = tpu.matmul %3, %4, %cst {dimension_numbers = #tpu.dot_dimension_numbers<[1], [0], [0], [1], [0, 0, 1, 1], [], []>} : vector<16x128xbf16>, vector<128x128xbf16>, vector<16x128xf32> -> vector<16x128xf32>
    %c0_4 = arith.constant 0 : index
    %c0_5 = arith.constant 0 : index
    %6 = vector.load %arg4[%c0_4, %c0_5] : memref<1x128xf32, #tpu.memory_space<vmem>>, vector<1x128xf32>
    %7 = vector.broadcast %6 : vector<1x128xf32> to vector<16x128xf32>
    %8 = arith.addf %5, %7 : vector<16x128xf32>
    %cst_6 = arith.constant 0.000000e+00 : f32
    %9 = vector.broadcast %cst_6 : f32 to vector<16x128xf32>
    %10 = arith.maximumf %8, %9 : vector<16x128xf32>
    %c0_7 = arith.constant 0 : index
    %c0_8 = arith.constant 0 : index
    %11 = vector.load %arg7[%c0_7, %c0_8] : memref<16x128xf32, #tpu.memory_space<vmem>>, vector<16x128xf32>
    %12 = arith.truncf %10 : vector<16x128xf32> to vector<16x128xbf16>
    %c0_9 = arith.constant 0 : index
    %c0_10 = arith.constant 0 : index
    %13 = vector.load %arg5[%c0_9, %c0_10] : memref<128x128xbf16, #tpu.memory_space<vmem>>, vector<128x128xbf16>
    %cst_11 = arith.constant dense<0.000000e+00> : vector<16x128xf32>
    %14 = tpu.matmul %12, %13, %cst_11 {dimension_numbers = #tpu.dot_dimension_numbers<[1], [0], [0], [1], [0, 0, 1, 1], [], []>} : vector<16x128xbf16>, vector<128x128xbf16>, vector<16x128xf32> -> vector<16x128xf32>
    %15 = arith.addf %11, %14 : vector<16x128xf32>
    %c0_12 = arith.constant 0 : index
    %c0_13 = arith.constant 0 : index
    %16 = vector.load %arg7[%c0_12, %c0_13] : memref<16x128xf32, #tpu.memory_space<vmem>>, vector<16x128xf32>
    tpu.vector_store %arg7[%c0_12, %c0_13], %15 {strides = array<i32>} : memref<16x128xf32, #tpu.memory_space<vmem>>, vector<16x128xf32>,
    return
  }
  func.func @transform_0(%arg0: i32, %arg1: i32) -> (i32, i32) {
    %c0_i32 = arith.constant 0 : i32
    %c0_i32_0 = arith.constant 0 : i32
    return %arg0, %c0_i32 : i32, i32
  }
  func.func @transform_1(%arg0: i32, %arg1: i32) -> (i32, i32) {
    %c0_i32 = arith.constant 0 : i32
    %c0_i32_0 = arith.constant 0 : i32
    return %c0_i32, %arg1 : i32, i32
  }
  func.func @transform_2(%arg0: i32, %arg1: i32) -> (i32, i32) {
    %c0_i32 = arith.constant 0 : i32
    %c0_i32_0 = arith.constant 0 : i32
    return %c0_i32, %arg1 : i32, i32
  }
  func.func @transform_3(%arg0: i32, %arg1: i32) -> (i32, i32) {
    %c0_i32 = arith.constant 0 : i32
    %c0_i32_0 = arith.constant 0 : i32
    return %arg1, %c0_i32 : i32, i32
  }
  func.func @transform_4(%arg0: i32, %arg1: i32) -> (i32, i32) {
    %c0_i32 = arith.constant 0 : i32
    %c0_i32_0 = arith.constant 0 : i32
    %c0_i32_1 = arith.constant 0 : i32
    return %c0_i32, %c0_i32_0 : i32, i32
  }
  func.func @transform_5(%arg0: i32, %arg1: i32) -> (i32, i32) {
    %c0_i32 = arith.constant 0 : i32
    %c0_i32_0 = arith.constant 0 : i32
    return %arg0, %c0_i32 : i32, i32
  }
}

</mosaic_0001>

<llo_original>
// kernel: tpu_custom_call.1
$region0: #{tpu_custom_call.1}
  #allocation0 [shape = 'u32[]', space=smem, size = 0x4, offset = 0x4, fixed_abs, tag = 'smem constant byte address 0x4 - core index']
  #allocation1 [shape = 'u32[144,128]{1,0:T(1,128)}', space=vmem, size = 0x12000, scoped, tag = 'internal scratch']
  %s0 = inlined_call_operand.hbm [shape: bf16[16,128], index: 0, kind: input, shape index: {}]
  %s1 = inlined_call_operand.hbm [shape: bf16[128,256], index: 1, kind: input, shape index: {}]
  %s2 = inlined_call_operand.vmem [shape: f32[1,256], index: 2, kind: input, shape index: {}]
  %s3 = inlined_call_operand.hbm [shape: bf16[256,128], index: 3, kind: input, shape index: {}]
  %s4 = inlined_call_operand.vmem [shape: f32[1,128], index: 4, kind: input, shape index: {}]
  %s5 = inlined_call_operand.hbm [shape: f32[16,128], index: 5, kind: output, shape index: {}]
  %s6 = sld [smem:[#allocation0]]
  $region69: #{tpu_custom_call.1} parent=0
    _
  %s8 = ssub.s32 1, %s6
  %s9 = scalar_select 0, %s8, %s6
  $region1: #{tpu_custom_call.1} parent=0
    #allocation2 [shape = 'u8[4096]{0}', space=vmem, size = 0x1000, scoped, tag = 'input window, operand 0, single buffered']
    #allocation3 [shape = 's32[2]{0}', space=sflag, size = 0x8, scoped, tag = 'scoped memory for tpu_custom_call.1']
    #allocation4 [shape = 's32[2]{0}', space=sflag, size = 0x8, scoped, tag = 'scoped memory for tpu_custom_call.1']
    #allocation5 [shape = 'u8[65536]{0}', space=vmem, size = 0x10000, scoped, tag = 'input window, operand 1']
    #allocation6 [shape = 's32[2]{0}', space=sflag, size = 0x8, scoped, tag = 'scoped memory for tpu_custom_call.1']
    #allocation7 [shape = 'u8[65536]{0}', space=vmem, size = 0x10000, scoped, tag = 'input window, operand 3']
    #allocation8 [shape = 'u8[8192]{0}', space=vmem, size = 0x2000, scoped, tag = 'output window, operand 0, single buffered']
    %10 = vsyncpa [#allocation3], 0
    %11 = vsyncpa [#allocation6], 0
    %s12 = scalar_lea.sflag [#allocation6], 1
    %13 = vsyncpa %s12, 0
    %14 = vsyncpa [#allocation4], 0
    loop: start=0, step=1, limit=4
    $region2: #{tpu_custom_call.1} parent=1 // loop_pre_header
      _
    $region3: #{tpu_custom_call.1} parent=1 // loop_header
      %s16 = sphi 0, %s20
      %p17 = scmp.ge.s32.totalorder %s16, 4
      %s23 = sphi 0, %s35
      %s24 = sphi 0, %s31
      %s25 = sphi 0, %s23
      %s26 = sphi 0, %s24
      %s27 = sphi 0, %s25
      %s28 = sphi 0, %s26
      %s38 = sphi 0, %s40
      %s41 = sphi 0, %s38
      %s42 = sphi 0, %s41
      %s58 = sphi 0, %s42
      %s64 = sphi 0, %s66
      %s67 = sphi 0, %s64
      %s68 = sphi 0, %s67
      %s84 = sphi 0, %s68
      %s90 = sphi 0, %s92
      %s93 = sphi 0, %s90
      %s94 = sphi 0, %s93
      %s110 = sphi 0, %s94
      %s116 = sphi 0, %s118
      %s119 = sphi 0, %s116
      %s120 = sphi 0, %s119
      %s136 = sphi 0, %s120
      %s140 = sphi 0, %s140
      %s142 = sphi 0, %s140
      %s143 = sphi 0, %s142
      %s157 = sphi 0, %s143
      %s163 = sphi 0, %s165
      %s166 = sphi 0, %s163
      %s167 = sphi 0, %s166
      %s183 = sphi 0, %s167
    $region4: #{tpu_custom_call.1} parent=1 // loop_header_branch
      %19 = sbr.rel (%p17) target = $region8
    $region5: #{tpu_custom_call.1} parent=1 // loop_body
      %s21 = ssub.s32 %s16, 1
      %s22 = ssub.s32 %s16, 2
      %s29 = sadd.s32 1, %s24
      %p30 = scmp.ge.s32.totalorder %s29, 2
      %s31 = scalar_select %p30, 0, %s29
      %s32 = sadd.s32 1, %s23
      %s33 = scalar_select %p30, %s32, %s23
      %p34 = scmp.ge.s32.totalorder %s33, 1
      %s35 = scalar_select %p34, 0, %s33
      %s36 = ssub.s32 %s23, %s35
      %p37 = scmp.eq.s32.totalorder %s36, 0
      %s39 = sadd.s32 %s38, 1
      %s40 = scalar_select %p37, %s38, %s39
      %p43 = pneg %p37
      %p44 = scmp.eq.s32.totalorder %s16, 1
      %p45 = por %p43, %p44
      %p46 = scmp.ne.s32.totalorder %s38, %s41
      %p47 = scmp.eq.s32.totalorder %s16, 0
      %p48 = por %p46, %p47
      %p49 = scmp.ne.s32.totalorder %s38, %s41
      %p50 = scmp.eq.s32.totalorder %s21, 1
      %p51 = por %p49, %p50
      %p52 = scmp.ne.s32.totalorder %s41, %s42
      %p53 = scmp.eq.s32.totalorder %s21, 0
      %p54 = por %p52, %p53
      %p55 = scmp.ne.s32.totalorder %s41, %s42
      %p56 = scmp.eq.s32.totalorder %s22, 1
      %p57 = por %p55, %p56
      %p59 = scmp.ne.s32.totalorder %s42, %s58
      %p60 = scmp.eq.s32.totalorder %s22, 0
      %p61 = por %p59, %p60
      %s62 = ssub.s32 %s24, %s31
      %p63 = scmp.eq.s32.totalorder %s62, 0
      %s65 = sadd.s32 %s64, 1
      %s66 = scalar_select %p63, %s64, %s65
      %p69 = pneg %p63
      %p70 = scmp.eq.s32.totalorder %s16, 1
      %p71 = por %p69, %p70
      %p72 = scmp.ne.s32.totalorder %s64, %s67
      %p73 = scmp.eq.s32.totalorder %s16, 0
      %p74 = por %p72, %p73
      %p75 = scmp.ne.s32.totalorder %s64, %s67
      %p76 = scmp.eq.s32.totalorder %s21, 1
      %p77 = por %p75, %p76
      %p78 = scmp.ne.s32.totalorder %s67, %s68
      %p79 = scmp.eq.s32.totalorder %s21, 0
      %p80 = por %p78, %p79
      %p81 = scmp.ne.s32.totalorder %s67, %s68
      %p82 = scmp.eq.s32.totalorder %s22, 1
      %p83 = por %p81, %p82
      %p85 = scmp.ne.s32.totalorder %s68, %s84
      %p86 = scmp.eq.s32.totalorder %s22, 0
      %p87 = por %p85, %p86
      %s88 = ssub.s32 %s24, %s31
      %p89 = scmp.eq.s32.totalorder %s88, 0
      %s91 = sadd.s32 %s90, 1
      %s92 = scalar_select %p89, %s90, %s91
      %p95 = pneg %p89
      %p96 = scmp.eq.s32.totalorder %s16, 1
      %p97 = por %p95, %p96
      %p98 = scmp.ne.s32.totalorder %s90, %s93
      %p99 = scmp.eq.s32.totalorder %s16, 0
      %p100 = por %p98, %p99
      %p101 = scmp.ne.s32.totalorder %s90, %s93
      %p102 = scmp.eq.s32.totalorder %s21, 1
      %p103 = por %p101, %p102
      %p104 = scmp.ne.s32.totalorder %s93, %s94
      %p105 = scmp.eq.s32.totalorder %s21, 0
      %p106 = por %p104, %p105
      %p107 = scmp.ne.s32.totalorder %s93, %s94
      %p108 = scmp.eq.s32.totalorder %s22, 1
      %p109 = por %p107, %p108
      %p111 = scmp.ne.s32.totalorder %s94, %s110
      %p112 = scmp.eq.s32.totalorder %s22, 0
      %p113 = por %p111, %p112
      %s114 = ssub.s32 %s24, %s31
      %p115 = scmp.eq.s32.totalorder %s114, 0
      %s117 = sadd.s32 %s116, 1
      %s118 = scalar_select %p115, %s116, %s117
      %p121 = pneg %p115
      %p122 = scmp.eq.s32.totalorder %s16, 1
      %p123 = por %p121, %p122
      %p124 = scmp.ne.s32.totalorder %s116, %s119
      %p125 = scmp.eq.s32.totalorder %s16, 0
      %p126 = por %p124, %p125
      %p127 = scmp.ne.s32.totalorder %s116, %s119
      %p128 = scmp.eq.s32.totalorder %s21, 1
      %p129 = por %p127, %p128
      %p130 = scmp.ne.s32.totalorder %s119, %s120
      %p131 = scmp.eq.s32.totalorder %s21, 0
      %p132 = por %p130, %p131
      %p133 = scmp.ne.s32.totalorder %s119, %s120
      %p134 = scmp.eq.s32.totalorder %s22, 1
      %p135 = por %p133, %p134
      %p137 = scmp.ne.s32.totalorder %s120, %s136
      %p138 = scmp.eq.s32.totalorder %s22, 0
      %p139 = por %p137, %p138
      %s141 = sadd.s32 %s140, 1
      %p144 = scmp.eq.s32.totalorder %s16, 1
      %p145 = scmp.ne.s32.totalorder %s140, %s142
      %p146 = scmp.eq.s32.totalorder %s16, 0
      %p147 = por %p145, %p146
      %p148 = scmp.ne.s32.totalorder %s140, %s142
      %p149 = scmp.eq.s32.totalorder %s21, 1
      %p150 = por %p148, %p149
      %p151 = scmp.ne.s32.totalorder %s142, %s143
      %p152 = scmp.eq.s32.totalorder %s21, 0
      %p153 = por %p151, %p152
      %p154 = scmp.ne.s32.totalorder %s142, %s143
      %p155 = scmp.eq.s32.totalorder %s22, 1
      %p156 = por %p154, %p155
      %p158 = scmp.ne.s32.totalorder %s143, %s157
      %p159 = scmp.eq.s32.totalorder %s22, 0
      %p160 = por %p158, %p159
      %s161 = ssub.s32 %s23, %s35
      %p162 = scmp.eq.s32.totalorder %s161, 0
      %s164 = sadd.s32 %s163, 1
      %s165 = scalar_select %p162, %s163, %s164
      %p168 = pneg %p162
      %p169 = scmp.eq.s32.totalorder %s16, 1
      %p170 = por %p168, %p169
      %p171 = scmp.ne.s32.totalorder %s163, %s166
      %p172 = scmp.eq.s32.totalorder %s16, 0
      %p173 = por %p171, %p172
      %p174 = scmp.ne.s32.totalorder %s163, %s166
      %p175 = scmp.eq.s32.totalorder %s21, 1
      %p176 = por %p174, %p175
      %p177 = scmp.ne.s32.totalorder %s166, %s167
      %p178 = scmp.eq.s32.totalorder %s21, 0
      %p179 = por %p177, %p178
      %p180 = scmp.ne.s32.totalorder %s166, %s167
      %p181 = scmp.eq.s32.totalorder %s22, 1
      %p182 = por %p180, %p181
      %p184 = scmp.ne.s32.totalorder %s167, %s183
      %p185 = scmp.eq.s32.totalorder %s22, 0
      %p186 = por %p184, %p185
      %p187 = scmp.le.s32.totalorder 1, %s16
      %p188 = scmp.lt.s32.totalorder %s16, 3
      %p189 = pnand %p187, %p188
      %p190 = pneg %p189
      // Predicated region
      $region9: #{tpu_custom_call.1} parent=5 // pred_check
        _
      $region10: #{tpu_custom_call.1} parent=5 // pred_check_branch
        %192 = sbr.rel (%p189) target = $region12
      $region11: #{tpu_custom_call.1} parent=5 // pred_region
        %s193 = ssub.s32 %s16, 1
        // Predicated region
        $region13: #{tpu_custom_call.1} parent=11 // pred_check
          %p194 = pneg %p54
        $region14: #{tpu_custom_call.1} parent=11 // pred_check_branch
          %196 = sbr.rel (%p194) target = $region16
        $region15: #{tpu_custom_call.1} parent=11 // pred_region
          %s197 = smul.u32 2, %s25
          %s199 = ssub.s32 128, 128
          %200 = vsyncadd [#allocation3], %s199
          %s201 = smul.addr %s197, 64
          %s202 = scalar_lea.hbm %s0, %s201
          %s203 = sshll.u32 [#allocation2], 4
          %s204 = int_to_ptr.vmem [resolvable:$true] %s203
          %209 = dma.hbm_to_vmem [thread:$0]  %s202, 128, %s204, [#allocation3], 64, 64, 4
        $region16: #{tpu_custom_call.1} parent=11 // pred_fallthru
          _
        // Predicated region
        $region17: #{tpu_custom_call.1} parent=11 // pred_check
          %p210 = pneg %p153
        $region18: #{tpu_custom_call.1} parent=11 // pred_check_branch
          %212 = sbr.rel (%p210) target = $region20
        $region19: #{tpu_custom_call.1} parent=11 // pred_region
          _
        $region20: #{tpu_custom_call.1} parent=11 // pred_fallthru
          _
      $region12: #{tpu_custom_call.1} parent=5 // pred_fallthru
        _
      %p213 = scmp.lt.s32.totalorder %s16, 2
      // Predicated region
      $region21: #{tpu_custom_call.1} parent=5 // pred_check
        %p214 = pneg %p213
      $region22: #{tpu_custom_call.1} parent=5 // pred_check_branch
        %216 = sbr.rel (%p214) target = $region24
      $region23: #{tpu_custom_call.1} parent=5 // pred_region
        // Predicated region
        $region25: #{tpu_custom_call.1} parent=23 // pred_check
          %p217 = pneg %p74
        $region26: #{tpu_custom_call.1} parent=23 // pred_check_branch
          %219 = sbr.rel (%p217) target = $region28
        $region27: #{tpu_custom_call.1} parent=23 // pred_region
          %s220 = sand.u32 %s16, 1
          %s221 = scalar_lea.sflag [#allocation6], %s220
          %s222 = sand.u32 %s64, 1
          %s223 = smul.addr %s222, 64
          %s224 = scalar_lea.vmem [#allocation5], %s223
          %s226 = ssub.s32 1024, 1024
          %227 = vsyncadd %s221, %s226
          %s228 = smul.addr %s24, 64
          %s229 = scalar_lea.hbm %s1, %s228
          %s230 = sshll.u32 %s224, 4
          %s231 = int_to_ptr.vmem [resolvable:$true] %s230
          %236 = dma.hbm_to_vmem [thread:$0]  %s229, 1024, %s231, %s221, 128, 64, 4
        $region28: #{tpu_custom_call.1} parent=23 // pred_fallthru
          _
        // Predicated region
        $region29: #{tpu_custom_call.1} parent=23 // pred_check
          %p237 = pneg %p100
        $region30: #{tpu_custom_call.1} parent=23 // pred_check_branch
          %239 = sbr.rel (%p237) target = $region32
        $region31: #{tpu_custom_call.1} parent=23 // pred_region
          %p240 = scmp.lt.s32.totalorder %s24, 1
          %s241 = scalar_select %p240, %s24, 1
          %s242 = scalar_lea.vmem %s2, %s241
        $region32: #{tpu_custom_call.1} parent=23 // pred_fallthru
          _
        // Predicated region
        $region33: #{tpu_custom_call.1} parent=23 // pred_check
          %p243 = pneg %p126
        $region34: #{tpu_custom_call.1} parent=23 // pred_check_branch
          %245 = sbr.rel (%p243) target = $region36
        $region35: #{tpu_custom_call.1} parent=23 // pred_region
          %s246 = sand.u32 %s16, 1
          %s247 = scalar_lea.sflag [#allocation6], %s246
          %s248 = sand.u32 %s116, 1
          %s249 = smul.addr %s248, 64
          %s250 = scalar_lea.vmem [#allocation7], %s249
          %s251 = smul.u32 16, %s24
          %s253 = ssub.s32 1024, 1024
          %254 = vsyncadd %s247, %s253
          %s255 = smul.addr %s251, 64
          %s256 = scalar_lea.hbm %s3, %s255
          %s257 = sshll.u32 %s250, 4
          %s258 = int_to_ptr.vmem [resolvable:$true] %s257
          %263 = dma.hbm_to_vmem [thread:$0]  %s256, 1024, %s258, %s247, 64, 64, 4
        $region36: #{tpu_custom_call.1} parent=23 // pred_fallthru
          _
      $region24: #{tpu_custom_call.1} parent=5 // pred_fallthru
        _
      %p264 = scmp.le.s32.totalorder 1, %s16
      %p265 = scmp.lt.s32.totalorder %s16, 3
      %p266 = pnand %p264, %p265
      %p267 = pneg %p266
      // Predicated region
      $region37: #{tpu_custom_call.1} parent=5 // pred_check
        _
      $region38: #{tpu_custom_call.1} parent=5 // pred_check_branch
        %269 = sbr.rel (%p266) target = $region40
      $region39: #{tpu_custom_call.1} parent=5 // pred_region
        %s270 = ssub.s32 %s16, 1
        // Predicated region
        $region41: #{tpu_custom_call.1} parent=39 // pred_check
          %p271 = pneg %p54
        $region42: #{tpu_custom_call.1} parent=39 // pred_check_branch
          %273 = sbr.rel (%p271) target = $region44
        $region43: #{tpu_custom_call.1} parent=39 // pred_region
          %274 = dma.done [#allocation3], 128
        $region44: #{tpu_custom_call.1} parent=39 // pred_fallthru
          _
        %s275 = sand.u32 %s21, 1
        %s276 = scalar_lea.sflag [#allocation6], %s275
        %s277 = sand.u32 %s67, 1
        %s278 = smul.addr %s277, 64
        %s279 = scalar_lea.vmem [#allocation5], %s278
        // Predicated region
        $region45: #{tpu_custom_call.1} parent=39 // pred_check
          %p280 = pneg %p80
        $region46: #{tpu_custom_call.1} parent=39 // pred_check_branch
          %282 = sbr.rel (%p280) target = $region48
        $region47: #{tpu_custom_call.1} parent=39 // pred_region
          %283 = dma.done %s276, 1024
        $region48: #{tpu_custom_call.1} parent=39 // pred_fallthru
          _
        %s284 = sand.u32 %s21, 1
        %s285 = scalar_lea.sflag [#allocation6], %s284
        %s286 = sand.u32 %s119, 1
        %s287 = smul.addr %s286, 64
        %s288 = scalar_lea.vmem [#allocation7], %s287
        // Predicated region
        $region49: #{tpu_custom_call.1} parent=39 // pred_check
          %p289 = pneg %p132
        $region50: #{tpu_custom_call.1} parent=39 // pred_check_branch
          %291 = sbr.rel (%p289) target = $region52
        $region51: #{tpu_custom_call.1} parent=39 // pred_region
          %292 = dma.done %s285, 1024
        $region52: #{tpu_custom_call.1} parent=39 // pred_fallthru
          _
        %p293 = pneg %p54
        %p294 = pneg %p51
        %s295 = sand.u32 %s21, 1
        %s296 = scalar_lea.sflag [#allocation6], %s295
        %s297 = sand.u32 %s67, 1
        %s298 = smul.addr %s297, 64
        %s299 = scalar_lea.vmem [#allocation5], %s298
        %p300 = pneg %p80
        %p301 = pneg %p77
        %p302 = scmp.lt.s32.totalorder %s26, 1
        %s303 = scalar_select %p302, %s26, 1
        %s304 = scalar_lea.vmem %s2, %s303
        %p305 = pneg %p106
        %p306 = pneg %p103
        %s307 = sand.u32 %s21, 1
        %s308 = scalar_lea.sflag [#allocation6], %s307
        %s309 = sand.u32 %s119, 1
        %s310 = smul.addr %s309, 64
        %s311 = scalar_lea.vmem [#allocation7], %s310
        %p312 = pneg %p132
        %p313 = pneg %p129
        %p314 = pneg %p153
        %p315 = pneg %p150
        %p316 = pneg %p179
        %p317 = pneg %p176
        %s318 = smul.u32 2, %s25
        %p319 = scmp.lt.s32.totalorder %s26, 1
        %s320 = scalar_select %p319, %s26, 1
        %s321 = scalar_lea.vmem %s2, %s320
        %s322 = smul.u32 16, %s26
        %s323 = smul.u32 2, %s25
        %p325 = scmp.eq.s32.totalorder %s26, 0
        // Predicated region
        $region53: #{tpu_custom_call.1} parent=39 // pred_check
          %p326 = pneg %p325
        $region54: #{tpu_custom_call.1} parent=39 // pred_check_branch
          %328 = sbr.rel (%p326) target = $region56
        $region55: #{tpu_custom_call.1} parent=39 // pred_region
          %v329 = vld [vmem:[%s4] sm:$0x1]
          %v331 = vlaneseq
          %v332 = vshrl.u32 %v331, 7
          %v333 = vsub.s32 0, %v332
          %v334 = vrot.slane %v329, %v333
          %336 = vst [vmem:[#allocation8] sm:$0xff] %v334
          %337 = vst [vmem:[#allocation8 + $0x8] sm:$0xff] %v334
        $region56: #{tpu_custom_call.1} parent=39 // pred_fallthru
          _
        %v338 = vld [vmem:[#allocation2] sm:$0xf]
        %v339 = vld [vmem:[#allocation2 + $0x4] sm:$0xf]
        %v340 = vld [vmem:[%s279] sm:$0xf]
        %v341 = vld [vmem:[%s279 + $0x4] sm:$0xf]
        %v342 = vld [vmem:[%s279 + $0x8] sm:$0xf]
        %v343 = vld [vmem:[%s279 + $0xc] sm:$0xf]
        %v344 = vld [vmem:[%s279 + $0x10] sm:$0xf]
        %v345 = vld [vmem:[%s279 + $0x14] sm:$0xf]
        %v346 = vld [vmem:[%s279 + $0x18] sm:$0xf]
        %v347 = vld [vmem:[%s279 + $0x1c] sm:$0xf]
        %v348 = vld [vmem:[%s279 + $0x20] sm:$0xf]
        %v349 = vld [vmem:[%s279 + $0x24] sm:$0xf]
        %v350 = vld [vmem:[%s279 + $0x28] sm:$0xf]
        %v351 = vld [vmem:[%s279 + $0x2c] sm:$0xf]
        %v352 = vld [vmem:[%s279 + $0x30] sm:$0xf]
        %v353 = vld [vmem:[%s279 + $0x34] sm:$0xf]
        %v354 = vld [vmem:[%s279 + $0x38] sm:$0xf]
        %v355 = vld [vmem:[%s279 + $0x3c] sm:$0xf]
        %v356 = vld [vmem:[%s321] sm:$0x1]
        %v358 = vlaneseq
        %v359 = vshrl.u32 %v358, 7
        %v360 = vsub.s32 0, %v359
        %v361 = vrot.slane %v356, %v360
        %v365 = vunpack.c.l.b16 %v338
        %v366 = vunpack.c.l.b16 %v339
        %v367 = vpack.c.b16 %v366, %v365
        %v385 = vunpack.c.l.b16 %v340
        %v386 = vunpack.c.l.b16 %v341
        %v387 = vunpack.c.l.b16 %v342
        %v388 = vunpack.c.l.b16 %v343
        %v389 = vunpack.c.l.b16 %v344
        %v390 = vunpack.c.l.b16 %v345
        %v391 = vunpack.c.l.b16 %v346
        %v392 = vunpack.c.l.b16 %v347
        %v393 = vunpack.c.l.b16 %v348
        %v394 = vunpack.c.l.b16 %v349
        %v395 = vunpack.c.l.b16 %v350
        %v396 = vunpack.c.l.b16 %v351
        %v397 = vunpack.c.l.b16 %v352
        %v398 = vunpack.c.l.b16 %v353
        %v399 = vunpack.c.l.b16 %v354
        %v400 = vunpack.c.l.b16 %v355
        %v401 = vpack.c.b16 %v386, %v385
        %v402 = vpack.c.b16 %v388, %v387
        %v403 = vpack.c.b16 %v390, %v389
        %v404 = vpack.c.b16 %v392, %v391
        %v405 = vpack.c.b16 %v394, %v393
        %v406 = vpack.c.b16 %v396, %v395
        %v407 = vpack.c.b16 %v398, %v397
        %v408 = vpack.c.b16 %v400, %v399
        %417 = vmatprep.subr.bf16.mxu0 0
        %418 = vmatpush1.bf16.msra.mxu0 %v408
        %419 = vmatprep.subr.bf16.mxu0 0
        %420 = vmatpush1.bf16.msra.mxu0 %v407
        %421 = vmatprep.subr.bf16.mxu0 0
        %422 = vmatpush1.bf16.msra.mxu0 %v406
        %423 = vmatprep.subr.bf16.mxu0 0
        %424 = vmatpush1.bf16.msra.mxu0 %v405
        %425 = vmatprep.subr.bf16.mxu0 0
        %426 = vmatpush1.bf16.msra.mxu0 %v404
        %427 = vmatprep.subr.bf16.mxu0 0
        %428 = vmatpush1.bf16.msra.mxu0 %v403
        %429 = vmatprep.subr.bf16.mxu0 0
        %430 = vmatpush1.bf16.msra.mxu0 %v402
        %431 = vmatprep.subr.bf16.mxu0 0
        %432 = vmatpush1.bf16.msra.mxu0 %v401
        %433 = vmatprep.subr.bf16.mxu0 0
        %434 = vmatpush2.bf16.msra.mxu0 0
        %435 = vmatprep.subr.bf16.mxu0 0
        %436 = vmatpush2.bf16.msra.mxu0 0
        %437 = vmatprep.subr.bf16.mxu0 0
        %438 = vmatpush2.bf16.msra.mxu0 0
        %439 = vmatprep.subr.bf16.mxu0 0
        %440 = vmatpush2.bf16.msra.mxu0 0
        %441 = vmatprep.subr.bf16.mxu0 0
        %442 = vmatpush2.bf16.msra.mxu0 0
        %443 = vmatprep.subr.bf16.mxu0 0
        %444 = vmatpush2.bf16.msra.mxu0 0
        %445 = vmatprep.subr.bf16.mxu0 0
        %446 = vmatpush2.bf16.msra.mxu0 0
        %447 = vmatprep.subr.bf16.mxu0 0
        %448 = vmatpush2.bf16.msra.mxu0 0
        %449 = vmatprep.mubr.bf16.mxu0 0
        %450 = vmatmul.mubr.bf16.gmra.mxu0 %v367
        %v451 = vpop.f32.mrf.mxu0
        %v452 = vadd.f32 %v361, %v451
        %v453 = vpop.f32.mrf.mxu0
        %v454 = vpop.f32.mrf.mxu0
        %v455 = vadd.f32 %v361, %v454
        %v456 = vpop.f32.mrf.mxu0
        %457 = vdwg.mxu0
        %v458 = vmax.f32 %v452, 0.0
        %v459 = vmax.f32 %v455, 0.0
        %v460 = vld [vmem:[#allocation8] sm:$0xff]
        %v461 = vld [vmem:[#allocation8 + $0x8] sm:$0xff]
        %v462 = vpack.c.bf16 %v459, %v458
        %v463 = vld [vmem:[%s288] sm:$0xf]
        %v464 = vld [vmem:[%s288 + $0x4] sm:$0xf]
        %v465 = vld [vmem:[%s288 + $0x8] sm:$0xf]
        %v466 = vld [vmem:[%s288 + $0xc] sm:$0xf]
        %v467 = vld [vmem:[%s288 + $0x10] sm:$0xf]
        %v468 = vld [vmem:[%s288 + $0x14] sm:$0xf]
        %v469 = vld [vmem:[%s288 + $0x18] sm:$0xf]
        %v470 = vld [vmem:[%s288 + $0x1c] sm:$0xf]
        %v471 = vld [vmem:[%s288 + $0x20] sm:$0xf]
        %v472 = vld [vmem:[%s288 + $0x24] sm:$0xf]
        %v473 = vld [vmem:[%s288 + $0x28] sm:$0xf]
        %v474 = vld [vmem:[%s288 + $0x2c] sm:$0xf]
        %v475 = vld [vmem:[%s288 + $0x30] sm:$0xf]
        %v476 = vld [vmem:[%s288 + $0x34] sm:$0xf]
        %v477 = vld [vmem:[%s288 + $0x38] sm:$0xf]
        %v478 = vld [vmem:[%s288 + $0x3c] sm:$0xf]
        %v495 = vunpack.c.l.b16 %v463
        %v496 = vunpack.c.l.b16 %v464
        %v497 = vunpack.c.l.b16 %v465
        %v498 = vunpack.c.l.b16 %v466
        %v499 = vunpack.c.l.b16 %v467
        %v500 = vunpack.c.l.b16 %v468
        %v501 = vunpack.c.l.b16 %v469
        %v502 = vunpack.c.l.b16 %v470
        %v503 = vunpack.c.l.b16 %v471
        %v504 = vunpack.c.l.b16 %v472
        %v505 = vunpack.c.l.b16 %v473
        %v506 = vunpack.c.l.b16 %v474
        %v507 = vunpack.c.l.b16 %v475
        %v508 = vunpack.c.l.b16 %v476
        %v509 = vunpack.c.l.b16 %v477
        %v510 = vunpack.c.l.b16 %v478
        %v511 = vpack.c.b16 %v496, %v495
        %v512 = vpack.c.b16 %v498, %v497
        %v513 = vpack.c.b16 %v500, %v499
        %v514 = vpack.c.b16 %v502, %v501
        %v515 = vpack.c.b16 %v504, %v503
        %v516 = vpack.c.b16 %v506, %v505
        %v517 = vpack.c.b16 %v508, %v507
        %v518 = vpack.c.b16 %v510, %v509
        %527 = vmatprep.subr.bf16.mxu0 0
        %528 = vmatpush1.bf16.msra.mxu0 %v518
        %529 = vmatprep.subr.bf16.mxu0 0
        %530 = vmatpush1.bf16.msra.mxu0 %v517
        %531 = vmatprep.subr.bf16.mxu0 0
        %532 = vmatpush1.bf16.msra.mxu0 %v516
        %533 = vmatprep.subr.bf16.mxu0 0
        %534 = vmatpush1.bf16.msra.mxu0 %v515
        %535 = vmatprep.subr.bf16.mxu0 0
        %536 = vmatpush1.bf16.msra.mxu0 %v514
        %537 = vmatprep.subr.bf16.mxu0 0
        %538 = vmatpush1.bf16.msra.mxu0 %v513
        %539 = vmatprep.subr.bf16.mxu0 0
        %540 = vmatpush1.bf16.msra.mxu0 %v512
        %541 = vmatprep.subr.bf16.mxu0 0
        %542 = vmatpush1.bf16.msra.mxu0 %v511
        %543 = vmatprep.subr.bf16.mxu0 0
        %544 = vmatpush2.bf16.msra.mxu0 0
        %545 = vmatprep.subr.bf16.mxu0 0
        %546 = vmatpush2.bf16.msra.mxu0 0
        %547 = vmatprep.subr.bf16.mxu0 0
        %548 = vmatpush2.bf16.msra.mxu0 0
        %549 = vmatprep.subr.bf16.mxu0 0
        %550 = vmatpush2.bf16.msra.mxu0 0
        %551 = vmatprep.subr.bf16.mxu0 0
        %552 = vmatpush2.bf16.msra.mxu0 0
        %553 = vmatprep.subr.bf16.mxu0 0
        %554 = vmatpush2.bf16.msra.mxu0 0
        %555 = vmatprep.subr.bf16.mxu0 0
        %556 = vmatpush2.bf16.msra.mxu0 0
        %557 = vmatprep.subr.bf16.mxu0 0
        %558 = vmatpush2.bf16.msra.mxu0 0
        %559 = vmatprep.mubr.bf16.mxu0 0
        %560 = vmatmul.mubr.bf16.gmra.mxu0 %v462
        %v561 = vpop.f32.mrf.mxu0
        %v562 = vadd.f32 0.0, %v561
        %v563 = vpop.f32.mrf.mxu0
        %v564 = vpop.f32.mrf.mxu0
        %v565 = vadd.f32 0.0, %v564
        %v566 = vpop.f32.mrf.mxu0
        %567 = vdwg.mxu0
        %v568 = vadd.f32 %v460, %v562
        %v569 = vadd.f32 %v461, %v565
        %570 = vst [vmem:[#allocation8] sm:$0xff] %v568
        %571 = vst [vmem:[#allocation8 + $0x8] sm:$0xff] %v569
        // Predicated region
        $region57: #{tpu_custom_call.1} parent=39 // pred_check
          %p572 = pneg %p176
        $region58: #{tpu_custom_call.1} parent=39 // pred_check_branch
          %574 = sbr.rel (%p572) target = $region60
        $region59: #{tpu_custom_call.1} parent=39 // pred_region
          %s575 = smul.u32 2, %s25
          %s577 = ssub.s32 256, 256
          %578 = vsyncadd [#allocation4], %s577
          %s579 = smul.addr %s575, 128
          %s580 = scalar_lea.hbm %s5, %s579
          %s581 = sshll.u32 [#allocation8], 4
          %s582 = int_to_ptr.vmem [resolvable:$true] %s581
          %587 = dma.vmem_to_hbm [thread:$0]  %s582, 256, %s580, [#allocation4], 128, 128, 8
        $region60: #{tpu_custom_call.1} parent=39 // pred_fallthru
          _
        // Predicated region
        $region61: #{tpu_custom_call.1} parent=39 // pred_check
          %p588 = pneg %p176
        $region62: #{tpu_custom_call.1} parent=39 // pred_check_branch
          %590 = sbr.rel (%p588) target = $region64
        $region63: #{tpu_custom_call.1} parent=39 // pred_region
          %591 = dma.done [#allocation4], 256
        $region64: #{tpu_custom_call.1} parent=39 // pred_fallthru
          _
      $region40: #{tpu_custom_call.1} parent=5 // pred_fallthru
        _
      %p592 = scmp.le.s32.totalorder 2, %s16
      // Predicated region
      $region65: #{tpu_custom_call.1} parent=5 // pred_check
        %p593 = pneg %p592
      $region66: #{tpu_custom_call.1} parent=5 // pred_check_branch
        %595 = sbr.rel (%p593) target = $region68
      $region67: #{tpu_custom_call.1} parent=5 // pred_region
        %s596 = ssub.s32 %s16, 2
      $region68: #{tpu_custom_call.1} parent=5 // pred_fallthru
        _
    $region6: #{tpu_custom_call.1} parent=1 // loop_footer
      %s20 = sadd.s32 1, %s16
    $region7: #{tpu_custom_call.1} parent=1 // loop_footer_branch
      %15 = sbr.rel target = $region3
    $region8: #{tpu_custom_call.1} parent=1 // loop_exit
      _
    %597 = vsyncpa [#allocation3], 1
    %s598 = scalar_lea.sflag [#allocation3], 1
    %599 = vsyncpa %s598, 1
    %600 = vsyncpa [#allocation6], 1
    %s601 = scalar_lea.sflag [#allocation6], 1
    %602 = vsyncpa %s601, 1
    %603 = vsyncpa [#allocation4], 1
    %s604 = scalar_lea.sflag [#allocation4], 1
    %605 = vsyncpa %s604, 1

</llo_original>
